<compile_context>
chip_gen: v7x
topology: tpu7x:2x2x1
jax: 0.10.0
libtpu: 0.0.40
codegen_flags: <defaults>
</compile_context>

<pallas_src>
import jax
import jax.numpy as jnp
from jax.experimental import pallas as pl
from jax.experimental.pallas import tpu as pltpu

_MAX_F_BLK = 2048   # lanes per block (multiple of 128)
_MAX_B_BLK = 256    # sublanes per block (multiple of 8)


def _round_up(x: int, m: int) -> int:
    return ((x + m - 1) // m) * m


def _pick_lane_block(f: int) -> tuple[int, int]:
    """(block, padded_dim) for the flattened (time*channel) lane axis."""
    f_pad = _round_up(f, 128)
    if f_pad <= _MAX_F_BLK:
        return f_pad, f_pad
    return _MAX_F_BLK, _round_up(f, _MAX_F_BLK)


def _pick_sublane_block(b: int) -> tuple[int, int]:
    """(block, padded_dim) for the batch (sublane) axis."""
    if b <= _MAX_B_BLK:
        return b, b            # single full-axis block, no padding
    return _MAX_B_BLK, _round_up(b, _MAX_B_BLK)


def _wts_loss_kernel(w_ref, t_ref, p_ref, o_ref, acc_ref):
    """Weighted time-series squared-error loss (accumulated over grid axis 1).

    w_ref:   (1, F_BLK)      pre-scaled weights (already include 1/(T·Σw))
    t_ref:   (B_BLK, F_BLK)  targets block
    p_ref:   (B_BLK, F_BLK)  predictions block
    o_ref:   (B_BLK, 1)      per-batch loss (written once, on the last step)
    acc_ref: (B_BLK, 1) f32  VMEM scratch accumulator
    """
    f = pl.program_id(1)

    @pl.when(f == 0)
    def _():
        acc_ref[...] = jnp.zeros_like(acc_ref)

    # f32 residuals (mandatory on v5e; cheap VPU filler under the HBM roofline
    # elsewhere).  TODO(synk): on v6e/v7x a bf16 residual/square path would
    # halve vreg pressure for bf16 inputs.
    r = p_ref[...].astype(jnp.float32) - t_ref[...].astype(jnp.float32)
    wr2 = w_ref[...] * r * r                                   # VPU elementwise
    acc_ref[...] += jnp.sum(wr2, axis=-1, keepdims=True)       # XLU lane reduce

    @pl.when(f == pl.num_programs(1) - 1)
    def _():
        o_ref[...] = acc_ref[...]


class WeightedTimeSeriesLoss:
    """JAX/Pallas port of tsdm.metrics.WeightedTimeSeriesLoss (Φ = squared residual)."""

    def __init__(self, weight, *, normalize_time=True, normalize_channels=False,
                 learnable=False):
        w = jnp.asarray(weight, jnp.float32)
        if w.ndim != 1:
            raise ValueError("this port supports a 1-D channel weight vector")
        if not (bool(jnp.all(w >= 0)) and bool(jnp.any(w > 0))):
            raise ValueError("Weights must be non-negative and at least one must be positive.")
        # TODO(synk): only the default config (normalize_time=True,
        # normalize_channels=False, time_axis=-2, channel_axis=-1,
        # no discount_function, Φ(r)=‖r‖²) is lowered.
        assert normalize_time and not normalize_channels
        del learnable  # learnable=False semantics (plain constant weights)
        self.weight = w / jnp.sum(w)   # PARAM, deterministic

    def __call__(self, targets, predictions):
        assert targets.shape == predictions.shape and targets.ndim == 3
        B, T, C = targets.shape
        assert self.weight.shape == (C,)

        F = T * C
        # Fold the 1/T time-mean into the (sum-normalized) channel weights and
        # tile over the flattened (time*channel) axis -> plain-sum accumulation.
        w_flat = jnp.tile(self.weight / T, T)                    # (F,)

        F_BLK, F_pad = _pick_lane_block(F)
        B_BLK, B_pad = _pick_sublane_block(B)

        # Lane-dense flattened layout (row-major reshape is free).
        t2 = targets.reshape(B, F)
        p2 = predictions.reshape(B, F)
        if F_pad != F or B_pad != B:
            t2 = jnp.pad(t2, ((0, B_pad - B), (0, F_pad - F)))
            p2 = jnp.pad(p2, ((0, B_pad - B), (0, F_pad - F)))
        if F_pad != F:
            w_flat = jnp.pad(w_flat, (0, F_pad - F))             # zero weight on pad
        w2 = w_flat.reshape(1, F_pad).astype(jnp.float32)

        grid = (B_pad // B_BLK, F_pad // F_BLK)
        # TODO(synk): for small B there is only one "parallel" block, so v7x's
        # second TensorCore idles; a two-level split of the reduction axis
        # across cores would fix that for tiny-batch workloads.

        out = pl.pallas_call(
            _wts_loss_kernel,
            out_shape=jax.ShapeDtypeStruct((B_pad, 1), jnp.float32),
            grid=grid,
            in_specs=[
                pl.BlockSpec((1, F_BLK), lambda b, f: (0, f)),        # weights
                pl.BlockSpec((B_BLK, F_BLK), lambda b, f: (b, f)),    # targets
                pl.BlockSpec((B_BLK, F_BLK), lambda b, f: (b, f)),    # predictions
            ],
            out_specs=pl.BlockSpec((B_BLK, 1), lambda b, f: (b, 0)),
            scratch_shapes=[pltpu.VMEM((B_BLK, 1), jnp.float32)],
            compiler_params=pltpu.CompilerParams(
                dimension_semantics=("parallel", "arbitrary"),
                vmem_limit_bytes=32 * 1024 * 1024,
            ),
        )(w2, t2, p2)

        return out[:B, 0]   # per-sequence loss, shape (B,)


if __name__ == "__main__":
    key = jax.random.PRNGKey(0)

    def reference(w, t, p):
        w_norm = (w / jnp.sum(w))[None, None, :]
        return jnp.mean(jnp.sum(w_norm * (p - t) ** 2, axis=-1), axis=-1)

    cases = [
        (2, 8, 32),    # F = 256: single lane-dense block
        (4, 80, 40),   # F = 3200: multi-block reduction + zero-padded tail
    ]
    for B, T, C in cases:
        key, k_t, k_p, k_w = jax.random.split(key, 4)
        targets = jax.random.normal(k_t, (B, T, C), jnp.float32)
        predictions = jax.random.normal(k_p, (B, T, C), jnp.float32)
        weight = jax.random.uniform(k_w, (C,), jnp.float32, minval=0.1, maxval=1.0)

        loss_fn = WeightedTimeSeriesLoss(weight)
        out = loss_fn(targets, predictions)
        jax.block_until_ready(out)

        ref = reference(weight, targets, predictions)
        assert out.shape == (B,), out.shape
        assert jnp.allclose(out, ref, rtol=1e-5, atol=1e-5), (out, ref)

    print("KERNEL_OK")
</pallas_src>

<mosaic_0001>
module attributes {stable_mosaic.version = 11 : i64} {
  func.func @_wts_loss_kernel(%arg0: i32, %arg1: i32, %arg2: memref<1x256xf32, #tpu.memory_space<vmem>>, %arg3: memref<2x256xf32, #tpu.memory_space<vmem>>, %arg4: memref<2x256xf32, #tpu.memory_space<vmem>>, %arg5: memref<2x1xf32, #tpu.memory_space<vmem>>, %arg6: memref<2x1xf32, #tpu.memory_space<vmem>>) attributes {dimension_semantics = [#tpu.dimension_semantics<parallel>, #tpu.dimension_semantics<arbitrary>], iteration_bounds = array<i64: 1, 1>, scalar_prefetch = 0 : i64, scratch_operands = 1 : i64, tpu.core_type = #tpu.core_type<tc>, window_params = [{transform_indices = @transform_0, window_bounds = array<i64: 1, 256>}, {transform_indices = @transform_1, window_bounds = array<i64: 2, 256>}, {transform_indices = @transform_2, window_bounds = array<i64: 2, 256>}, {transform_indices = @transform_3, window_bounds = array<i64: 2, 1>}]} {
    %c0_i32 = arith.constant 0 : i32
    %0 = arith.cmpi eq, %arg1, %c0_i32 : i32
    %1 = arith.extui %0 : i1 to i32
    %c0_i32_0 = arith.constant 0 : i32
    %2 = arith.cmpi ne, %1, %c0_i32_0 : i32
    scf.if %2 {
      %cst_12 = arith.constant 0.000000e+00 : f32
      %18 = vector.broadcast %cst_12 : f32 to vector<2x1xf32>
      %c0_13 = arith.constant 0 : index
      %c0_14 = arith.constant 0 : index
      %19 = vector.load %arg6[%c0_13, %c0_14] : memref<2x1xf32, #tpu.memory_space<vmem>>, vector<2x1xf32>
      tpu.vector_store %arg6[%c0_13, %c0_14], %18 {strides = array<i32>} : memref<2x1xf32, #tpu.memory_space<vmem>>, vector<2x1xf32>,
    } else {
    }
    %c0 = arith.constant 0 : index
    %c0_1 = arith.constant 0 : index
    %3 = vector.load %arg4[%c0, %c0_1] : memref<2x256xf32, #tpu.memory_space<vmem>>, vector<2x256xf32>
    %c0_2 = arith.constant 0 : index
    %c0_3 = arith.constant 0 : index
    %4 = vector.load %arg3[%c0_2, %c0_3] : memref<2x256xf32, #tpu.memory_space<vmem>>, vector<2x256xf32>
    %5 = arith.subf %3, %4 : vector<2x256xf32>
    %c0_4 = arith.constant 0 : index
    %c0_5 = arith.constant 0 : index
    %6 = vector.load %arg2[%c0_4, %c0_5] : memref<1x256xf32, #tpu.memory_space<vmem>>, vector<1x256xf32>
    %7 = vector.broadcast %6 : vector<1x256xf32> to vector<2x256xf32>
    %8 = arith.mulf %7, %5 : vector<2x256xf32>
    %9 = arith.mulf %8, %5 : vector<2x256xf32>
    %c0_6 = arith.constant 0 : index
    %c0_7 = arith.constant 0 : index
    %10 = vector.load %arg6[%c0_6, %c0_7] : memref<2x1xf32, #tpu.memory_space<vmem>>, vector<2x1xf32>
    %cst = arith.constant dense<0.000000e+00> : vector<2xf32>
    %11 = vector.multi_reduction <add>, %9, %cst [1] : vector<2x256xf32> to vector<2xf32>
    %12 = vector.shape_cast %11 : vector<2xf32> to vector<2x1xf32>
    %13 = arith.addf %10, %12 : vector<2x1xf32>
    %c0_8 = arith.constant 0 : index
    %c0_9 = arith.constant 0 : index
    %14 = vector.load %arg6[%c0_8, %c0_9] : memref<2x1xf32, #tpu.memory_space<vmem>>, vector<2x1xf32>
    tpu.vector_store %arg6[%c0_8, %c0_9], %13 {strides = array<i32>} : memref<2x1xf32, #tpu.memory_space<vmem>>, vector<2x1xf32>,
    %c0_i32_10 = arith.constant 0 : i32
    %15 = arith.cmpi eq, %arg1, %c0_i32_10 : i32
    %16 = arith.extui %15 : i1 to i32
    %c0_i32_11 = arith.constant 0 : i32
    %17 = arith.cmpi ne, %16, %c0_i32_11 : i32
    scf.if %17 {
      %c0_12 = arith.constant 0 : index
      %c0_13 = arith.constant 0 : index
      %18 = vector.load %arg6[%c0_12, %c0_13] : memref<2x1xf32, #tpu.memory_space<vmem>>, vector<2x1xf32>
      %c0_14 = arith.constant 0 : index
      %c0_15 = arith.constant 0 : index
      %19 = vector.load %arg5[%c0_14, %c0_15] : memref<2x1xf32, #tpu.memory_space<vmem>>, vector<2x1xf32>
      tpu.vector_store %arg5[%c0_14, %c0_15], %18 {strides = array<i32>} : memref<2x1xf32, #tpu.memory_space<vmem>>, vector<2x1xf32>,
    } else {
    }
    return
  }
  func.func @transform_0(%arg0: i32, %arg1: i32) -> (i32, i32) {
    %c0_i32 = arith.constant 0 : i32
    %c0_i32_0 = arith.constant 0 : i32
    return %c0_i32, %arg1 : i32, i32
  }
  func.func @transform_1(%arg0: i32, %arg1: i32) -> (i32, i32) {
    %c0_i32 = arith.constant 0 : i32
    return %arg0, %arg1 : i32, i32
  }
  func.func @transform_2(%arg0: i32, %arg1: i32) -> (i32, i32) {
    %c0_i32 = arith.constant 0 : i32
    return %arg0, %arg1 : i32, i32
  }
  func.func @transform_3(%arg0: i32, %arg1: i32) -> (i32, i32) {
    %c0_i32 = arith.constant 0 : i32
    %c0_i32_0 = arith.constant 0 : i32
    return %arg0, %c0_i32 : i32, i32
  }
}

</mosaic_0001>

<llo_original>
// kernel: tpu_custom_call.1
$region0: #{tpu_custom_call.1}
  #allocation0 [shape = 'u32[]', space=smem, size = 0x4, offset = 0x4, fixed_abs, tag = 'smem constant byte address 0x4 - core index']
  #allocation1 [shape = 'u32[144,128]{1,0:T(1,128)}', space=vmem, size = 0x12000, scoped, tag = 'internal scratch']
  #allocation2 [shape = 'f32[2,1]{1,0:T(2,128)}', space=vmem, size = 0x400, scoped, tag = 'scratch operand']
  %s0 = inlined_call_operand.hbm [shape: f32[1,256], index: 0, kind: input, shape index: {}]
  %s1 = inlined_call_operand.hbm [shape: f32[2,256], index: 1, kind: input, shape index: {}]
  %s2 = inlined_call_operand.vmem [shape: f32[2,256], index: 2, kind: input, shape index: {}]
  %s3 = inlined_call_operand.vmem [shape: f32[2,1], index: 3, kind: output, shape index: {}]
  %s4 = sld [smem:[#allocation0]]
  $region38: #{tpu_custom_call.1} parent=0
    _
  %s6 = ssub.s32 1, %s4
  %s7 = scalar_select 0, %s6, %s4
  $region1: #{tpu_custom_call.1} parent=0
    #allocation3 [shape = 'u8[1024]{0}', space=vmem, size = 0x400, scoped, tag = 'input window, operand 0, single buffered']
    #allocation4 [shape = 's32[1]{0}', space=sflag, size = 0x4, scoped, tag = 'scoped memory for tpu_custom_call.1']
    #allocation5 [shape = 'u8[2048]{0}', space=vmem, size = 0x800, scoped, tag = 'input window, operand 1, single buffered']
    #allocation6 [shape = 's32[1]{0}', space=sflag, size = 0x4, scoped, tag = 'scoped memory for tpu_custom_call.1']
    %8 = vsyncpa [#allocation4], 0
    %9 = vsyncpa [#allocation6], 0
    // Predicated region
    $region2: #{tpu_custom_call.1} parent=1 // pred_check
      _
    $region3: #{tpu_custom_call.1} parent=1 // pred_check_branch
      %11 = sbr.rel (0) target = $region5
    $region4: #{tpu_custom_call.1} parent=1 // pred_region
      %s13 = ssub.s32 32, 32
      %14 = vsyncadd [#allocation4], %s13
      %s16 = sshll.u32 [#allocation3], 4
      %s17 = int_to_ptr.vmem [resolvable:$true] %s16
      %19 = dma.hbm_to_vmem [thread:$0]  %s0, 32, %s17, [#allocation4]
    $region5: #{tpu_custom_call.1} parent=1 // pred_fallthru
      _
    // Predicated region
    $region6: #{tpu_custom_call.1} parent=1 // pred_check
      _
    $region7: #{tpu_custom_call.1} parent=1 // pred_check_branch
      %21 = sbr.rel (0) target = $region9
    $region8: #{tpu_custom_call.1} parent=1 // pred_region
      %s23 = ssub.s32 64, 64
      %24 = vsyncadd [#allocation6], %s23
      %s26 = sshll.u32 [#allocation5], 4
      %s27 = int_to_ptr.vmem [resolvable:$true] %s26
      %29 = dma.hbm_to_vmem [thread:$0]  %s1, 64, %s27, [#allocation6]
    $region9: #{tpu_custom_call.1} parent=1 // pred_fallthru
      _
    // Predicated region
    $region10: #{tpu_custom_call.1} parent=1 // pred_check
      _
    $region11: #{tpu_custom_call.1} parent=1 // pred_check_branch
      %31 = sbr.rel (0) target = $region13
    $region12: #{tpu_custom_call.1} parent=1 // pred_region
      _
    $region13: #{tpu_custom_call.1} parent=1 // pred_fallthru
      _
    // Predicated region
    $region14: #{tpu_custom_call.1} parent=1 // pred_check
      _
    $region15: #{tpu_custom_call.1} parent=1 // pred_check_branch
      %33 = sbr.rel (0) target = $region17
    $region16: #{tpu_custom_call.1} parent=1 // pred_region
      %34 = dma.done [#allocation4], 32
    $region17: #{tpu_custom_call.1} parent=1 // pred_fallthru
      _
    // Predicated region
    $region18: #{tpu_custom_call.1} parent=1 // pred_check
      _
    $region19: #{tpu_custom_call.1} parent=1 // pred_check_branch
      %36 = sbr.rel (0) target = $region21
    $region20: #{tpu_custom_call.1} parent=1 // pred_region
      %37 = dma.done [#allocation6], 64
    $region21: #{tpu_custom_call.1} parent=1 // pred_fallthru
      _
    %p38 = scmp.eq.s32.totalorder 0, 0
    // Predicated region
    $region22: #{tpu_custom_call.1} parent=1 // pred_check
      %p39 = pneg %p38
    $region23: #{tpu_custom_call.1} parent=1 // pred_check_branch
      %41 = sbr.rel (%p39) target = $region25
    $region24: #{tpu_custom_call.1} parent=1 // pred_region
      %vm42 = vcmask 1024
      %43 = vst.msk [vmem:[#allocation2] sm:$0x3] %vm42, 0.0
    $region25: #{tpu_custom_call.1} parent=1 // pred_fallthru
      _
    %v44 = vld [vmem:[%s2] sm:$0xf]
    %v45 = vld [vmem:[#allocation5] sm:$0xf]
    %v46 = vsub.f32 %v44, %v45
    %v47 = vld [vmem:[#allocation3] sm:$0x3]
    %v49 = vlaneseq
    %v50 = vshrl.u32 %v49, 7
    %v51 = vsub.s32 0, %v50
    %v52 = vrot.slane %v47, %v51
    %v53 = vlaneseq
    %v54 = vshrl.u32 %v53, 7
    %v55 = vsub.s32 1, %v54
    %v56 = vrot.slane %v47, %v55
    %v61 = vunpack.c.l.s4 1983009808
    %v62 = vunpack.c.0.s8 %v61
    %v63 = vlaneseq
    %v64 = vshrl.u32 %v63, 7
    %v65 = vsub.s32 %v62, %v64
    %v66 = vrot.slane %v46, %v65
    %v67 = vcombine.high %v66, %v66
    %v70 = vmul.f32 %v52, %v66
    %v71 = vmul.f32 %v56, %v67
    %v72 = vmul.f32 %v70, %v66
    %v73 = vmul.f32 %v71, %v67
    %v74 = vld [vmem:[#allocation2] sm:$0x3]
    %vm75 = vcmask 1041408
    %v76 = vsel %vm75, %v72, 0.0
    %v77 = vsel %vm75, %v73, 0.0
    %v78 = vadd.f32 %v76, %v77
    %79 = vadd.xlane.f32.xlu0 %v78
    %v80 = vpop.xlane.xlu0 %79
    %v81 = vadd.f32 %v74, %v80
    %vm82 = vcmask 1024
    %83 = vst.msk [vmem:[#allocation2] sm:$0x3] %vm82, %v81
    // Predicated region
    $region26: #{tpu_custom_call.1} parent=1 // pred_check
      %p84 = pneg %p38
    $region27: #{tpu_custom_call.1} parent=1 // pred_check_branch
      %86 = sbr.rel (%p84) target = $region29
    $region28: #{tpu_custom_call.1} parent=1 // pred_region
      %v87 = vld [vmem:[#allocation2] sm:$0x3]
      %88 = vst.msk [vmem:[%s3] sm:$0x3] %vm82, %v87
    $region29: #{tpu_custom_call.1} parent=1 // pred_fallthru
      _
    // Predicated region
    $region30: #{tpu_custom_call.1} parent=1 // pred_check
      _
    $region31: #{tpu_custom_call.1} parent=1 // pred_check_branch
      %90 = sbr.rel (0) target = $region33
    $region32: #{tpu_custom_call.1} parent=1 // pred_region
      _
    $region33: #{tpu_custom_call.1} parent=1 // pred_fallthru
      _
    // Predicated region
    $region34: #{tpu_custom_call.1} parent=1 // pred_check
      _
    $region35: #{tpu_custom_call.1} parent=1 // pred_check_branch
      %92 = sbr.rel (0) target = $region37
    $region36: #{tpu_custom_call.1} parent=1 // pred_region
      _
    $region37: #{tpu_custom_call.1} parent=1 // pred_fallthru
      _
    %93 = vsyncpa [#allocation4], 1
    %94 = vsyncpa [#allocation6], 1

</llo_original>
